<compile_context>
chip_gen: v5e
topology: v5e:2x2
jax: 0.10.0
libtpu: 0.0.40
codegen_flags: <defaults>
</compile_context>

<pallas_src>
import functools

import jax
import jax.numpy as jnp
from jax.experimental import pallas as pl
from jax.experimental.pallas import tpu as pltpu

_LANE = 128                          # last-dim multiple for unmasked stores
_SUBLANE = 8                         # row-tile multiple
_VMEM_BUDGET = 48 * 1024 * 1024      # conservative per-TensorCore plan (v7x has 64 MiB)


def _round_up(x, m):
    return (x + m - 1) // m * m


def _cdiv(a, b):
    return (a + b - 1) // b


# ----------------------------------------------------------------------------- kernel
def _mlp_kernel(x_ref, w1_ref, w2_ref, w3_ref, b_ref, o_ref, *, quant_const):
    """One row-tile of the fused MLP: 3 MXU matmuls + 2 cheap VPU quantizations.

    x_ref : (bm, in_dim)   activations (cast to the weight compute dtype in-kernel)
    w1_ref: (in_dim, Dp)   fc1^T, output dim zero-padded to Dp lanes
    w2_ref: (Dp, Dp)       fc2^T
    w3_ref: (Dp, Doutp)    fc_out^T
    b_ref : (1, Doutp)     fc_out bias (f32, zero-padded)
    o_ref : (bm, Doutp)    output tile (lane-dense, single unmasked store)
    """
    cd = w1_ref.dtype
    x = x_ref[...].astype(cd)
    h = jnp.dot(x, w1_ref[...], preferred_element_type=jnp.float32)
    # spike(v) * quant_const == round(clamp(v, 0, quant_const)); exact small integers,
    # so the cast back to bf16 for the next MXU pass is lossless.
    s = jnp.round(jnp.clip(h, 0.0, quant_const)).astype(cd)
    h = jnp.dot(s, w2_ref[...], preferred_element_type=jnp.float32)
    s = jnp.round(jnp.clip(h, 0.0, quant_const)).astype(cd)
    y = jnp.dot(s, w3_ref[...], preferred_element_type=jnp.float32) + b_ref[...]
    o_ref[...] = y.astype(o_ref.dtype)


# --------------------------------------------------------------------- parameter prep
def prepare_mlp_params(w1, w2, w3, b3, *, compute_dtype=jnp.bfloat16):
    """One-time weight prep, hoisted out of the per-call hot path.

    Takes PyTorch-layout Linear weights ((out, in)), transposes them, zero-pads the
    hidden/output feature dims to multiples of 128 lanes, and casts to compute_dtype.
    """
    in_dim = w1.shape[1]
    out_dim = w3.shape[0]
    dp = _round_up(in_dim, _LANE)       # padded hidden width
    doutp = _round_up(out_dim, _LANE)   # padded output width

    def pad2(a, rows, cols):
        r, c = a.shape
        return jnp.pad(a, ((0, rows - r), (0, cols - c)))

    w1t = pad2(w1.T.astype(compute_dtype), in_dim, dp)   # contraction dim stays in_dim
    w2t = pad2(w2.T.astype(compute_dtype), dp, dp)
    w3t = pad2(w3.T.astype(compute_dtype), dp, doutp)
    b = jnp.pad(b3.astype(jnp.float32), (0, doutp - out_dim)).reshape(1, doutp)
    return dict(w1t=w1t, w2t=w2t, w3t=w3t, b=b, in_dim=in_dim, out_dim=out_dim)


# ------------------------------------------------------------------------ tile sizing
def _vmem_bytes(bm, in_dim, dp, doutp, x_isz, w_isz, o_isz, weight_buffers):
    weights = (in_dim * dp + dp * dp + dp * doutp + doutp * 4) * w_isz * weight_buffers
    streams = 2 * bm * in_dim * x_isz + 2 * bm * doutp * o_isz   # double-buffered tiles
    interm = 3 * bm * max(dp, doutp) * 4                         # f32 intermediates
    return weights + streams + interm


def _choose_block_m(m_rows, block_m, in_dim, dp, doutp, x_isz, w_isz, o_isz):
    # Ensure >=2 grid steps when M allows, so the "parallel" axis can feed both v7x TCs.
    bm = max(_SUBLANE, min(_round_up(block_m, _SUBLANE),
                           _round_up(_cdiv(m_rows, 2), _SUBLANE)))
    # Shrink until the plan fits the per-TC VMEM budget (counted with 2 weight buffers
    # so the plan also fits if the single-buffer fallback is taken).
    while bm > _SUBLANE and _vmem_bytes(bm, in_dim, dp, doutp, x_isz, w_isz, o_isz,
                                        2) > _VMEM_BUDGET:
        bm = max(_SUBLANE, _round_up(bm // 2, _SUBLANE))
    return bm


# ---------------------------------------------------------------------------- wrapper
def mlp_forward(x, params, *, quant_const=4.0, block_m=512):
    """Fused forward of the SNN MLP.  x: (..., in_dim); params from prepare_mlp_params."""
    in_dim, out_dim = params["in_dim"], params["out_dim"]
    w1t, w2t, w3t, b = params["w1t"], params["w2t"], params["w3t"], params["b"]
    dp, doutp = w2t.shape[0], w3t.shape[1]

    *lead, xd = x.shape
    assert xd == in_dim
    x2 = x.reshape(-1, in_dim)           # reshape of a contiguous array: no copy
    m_rows = x2.shape[0]

    x_isz = jnp.dtype(x2.dtype).itemsize
    w_isz = jnp.dtype(w1t.dtype).itemsize
    o_isz = jnp.dtype(x.dtype).itemsize
    bm = _choose_block_m(m_rows, block_m, in_dim, dp, doutp, x_isz, w_isz, o_isz)
    grid = (_cdiv(m_rows, bm),)          # partial edge block masked by Pallas, no jnp.pad

    vmem_limit = int(min(64 * 1024 * 1024,
                         max(2 * _vmem_bytes(bm, in_dim, dp, doutp,
                                             x_isz, w_isz, o_isz, 2),
                             8 * 1024 * 1024)))

    kernel = functools.partial(_mlp_kernel, quant_const=float(quant_const))

    def resident(shape, single_buffer):
        zeros = (0,) * len(shape)
        index_map = lambda i: zeros       # constant index_map -> VMEM-resident weight
        if single_buffer:
            # Never re-DMA'd, so one buffer is enough (halves resident-weight VMEM).
            return pl.BlockSpec(shape, index_map, pipeline_mode=pl.Buffered(1))
        return pl.BlockSpec(shape, index_map)

    def run(single_buffer_weights):
        grid_spec = pltpu.PrefetchScalarGridSpec(
            num_scalar_prefetch=0,
            grid=grid,
            in_specs=[
                pl.BlockSpec((bm, in_dim), lambda i: (i, 0)),        # x row tile
                resident(w1t.shape, single_buffer_weights),          # fc1^T
                resident(w2t.shape, single_buffer_weights),          # fc2^T
                resident(w3t.shape, single_buffer_weights),          # fc_out^T
                resident(b.shape, single_buffer_weights),            # bias
            ],
            out_specs=pl.BlockSpec((bm, doutp), lambda i: (i, 0)),   # lane-dense store
        )
        return pl.pallas_call(
            kernel,
            out_shape=jax.ShapeDtypeStruct((m_rows, doutp), x.dtype),
            grid_spec=grid_spec,
            compiler_params=pltpu.CompilerParams(
                dimension_semantics=("parallel",),
                vmem_limit_bytes=vmem_limit,
            ),
        )(x2, w1t, w2t, w3t, b)

    try:
        out = run(single_buffer_weights=True)
    except Exception:
        # Fallback for Pallas builds where pipeline_mode=pl.Buffered(1) is unsupported;
        # identical kernel, resident weights just get the default double buffer.
        out = run(single_buffer_weights=False)

    if doutp != out_dim:
        out = out[:, :out_dim]
    return out.reshape(*lead, out_dim)


# -------------------------------------------------------------------------- reference
def _reference(x, params, quant_const):
    """Pure-JAX reference mirroring the kernel's precision policy (bf16 in, f32 accum)."""
    cd = params["w1t"].dtype
    in_dim, out_dim = params["in_dim"], params["out_dim"]
    h = jnp.dot(x.reshape(-1, in_dim).astype(cd), params["w1t"],
                preferred_element_type=jnp.float32)
    h = jnp.round(jnp.clip(h, 0.0, quant_const)).astype(cd)
    h = jnp.dot(h, params["w2t"], preferred_element_type=jnp.float32)
    h = jnp.round(jnp.clip(h, 0.0, quant_const)).astype(cd)
    y = jnp.dot(h, params["w3t"], preferred_element_type=jnp.float32) + params["b"]
    return y[:, :out_dim].reshape(*x.shape[:-1], out_dim)


if __name__ == "__main__":
    key = jax.random.PRNGKey(0)
    B, S, in_dim, out_dim = 2, 8, 32, 32
    quant_const = 4.0

    k1, k2, k3, k4 = jax.random.split(key, 4)
    x = jax.random.normal(k1, (B, S, in_dim), dtype=jnp.float32)

    # Deterministic synthetic parameters in PyTorch Linear layout (out, in).
    lim = 1.0 / (in_dim ** 0.5)
    w1 = jax.random.uniform(k2, (in_dim, in_dim), jnp.float32, -lim, lim)
    w2 = jax.random.uniform(k3, (in_dim, in_dim), jnp.float32, -lim, lim)
    w3 = 0.02 * jax.random.normal(k4, (out_dim, in_dim), dtype=jnp.float32)  # trunc_normal std=0.02
    b3 = jnp.zeros((out_dim,), jnp.float32)   # module inits fc_out.bias to 0

    params = prepare_mlp_params(w1, w2, w3, b3, compute_dtype=jnp.bfloat16)

    out = mlp_forward(x, params, quant_const=quant_const)
    out = jax.block_until_ready(out)

    ref = _reference(x, params, quant_const)
    assert out.shape == (B, S, out_dim)
    assert jnp.allclose(out, ref, atol=1e-4, rtol=1e-4), float(jnp.max(jnp.abs(out - ref)))

    print("KERNEL_OK")
</pallas_src>

<mosaic_0001>
module attributes {stable_mosaic.version = 11 : i64} {
  func.func @_mlp_kernel(%arg0: i32, %arg1: memref<8x32xf32, #tpu.memory_space<vmem>>, %arg2: memref<32x128xbf16, #tpu.memory_space<vmem>>, %arg3: memref<128x128xbf16, #tpu.memory_space<vmem>>, %arg4: memref<128x128xbf16, #tpu.memory_space<vmem>>, %arg5: memref<1x128xf32, #tpu.memory_space<vmem>>, %arg6: memref<8x128xf32, #tpu.memory_space<vmem>>) attributes {dimension_semantics = [#tpu.dimension_semantics<parallel>], iteration_bounds = array<i64: 2>, scalar_prefetch = 0 : i64, scratch_operands = 0 : i64, tpu.core_type = #tpu.core_type<tc>, window_params = [{transform_indices = @transform_0, window_bounds = array<i64: 8, 32>}, {pipeline_mode = #tpu.pipeline_mode<synchronous>, transform_indices = @transform_1, window_bounds = array<i64: 32, 128>}, {pipeline_mode = #tpu.pipeline_mode<synchronous>, transform_indices = @transform_2, window_bounds = array<i64: 128, 128>}, {pipeline_mode = #tpu.pipeline_mode<synchronous>, transform_indices = @transform_3, window_bounds = array<i64: 128, 128>}, {pipeline_mode = #tpu.pipeline_mode<synchronous>, transform_indices = @transform_4, window_bounds = array<i64: 1, 128>}, {transform_indices = @transform_5, window_bounds = array<i64: 8, 128>}]} {
    %c0 = arith.constant 0 : index
    %c0_0 = arith.constant 0 : index
    %0 = vector.load %arg1[%c0, %c0_0] : memref<8x32xf32, #tpu.memory_space<vmem>>, vector<8x32xf32>
    %1 = arith.truncf %0 : vector<8x32xf32> to vector<8x32xbf16>
    %c0_1 = arith.constant 0 : index
    %c0_2 = arith.constant 0 : index
    %2 = vector.load %arg2[%c0_1, %c0_2] : memref<32x128xbf16, #tpu.memory_space<vmem>>, vector<32x128xbf16>
    %cst = arith.constant dense<0.000000e+00> : vector<8x128xf32>
    %3 = tpu.matmul %1, %2, %cst {dimension_numbers = #tpu.dot_dimension_numbers<[1], [0], [0], [1], [0, 0, 1, 1], [], []>} : vector<8x32xbf16>, vector<32x128xbf16>, vector<8x128xf32> -> vector<8x128xf32>
    %cst_3 = arith.constant 0.000000e+00 : f32
    %cst_4 = arith.constant 4.000000e+00 : f32
    %4 = vector.broadcast %cst_3 : f32 to vector<8x128xf32>
    %5 = arith.maximumf %4, %3 : vector<8x128xf32>
    %6 = vector.broadcast %cst_4 : f32 to vector<8x128xf32>
    %7 = arith.minimumf %6, %5 : vector<8x128xf32>
    %8 = math.roundeven %7 : vector<8x128xf32>
    %9 = arith.truncf %8 : vector<8x128xf32> to vector<8x128xbf16>
    %c0_5 = arith.constant 0 : index
    %c0_6 = arith.constant 0 : index
    %10 = vector.load %arg3[%c0_5, %c0_6] : memref<128x128xbf16, #tpu.memory_space<vmem>>, vector<128x128xbf16>
    %cst_7 = arith.constant dense<0.000000e+00> : vector<8x128xf32>
    %11 = tpu.matmul %9, %10, %cst_7 {dimension_numbers = #tpu.dot_dimension_numbers<[1], [0], [0], [1], [0, 0, 1, 1], [], []>} : vector<8x128xbf16>, vector<128x128xbf16>, vector<8x128xf32> -> vector<8x128xf32>
    %cst_8 = arith.constant 0.000000e+00 : f32
    %cst_9 = arith.constant 4.000000e+00 : f32
    %12 = vector.broadcast %cst_8 : f32 to vector<8x128xf32>
    %13 = arith.maximumf %12, %11 : vector<8x128xf32>
    %14 = vector.broadcast %cst_9 : f32 to vector<8x128xf32>
    %15 = arith.minimumf %14, %13 : vector<8x128xf32>
    %16 = math.roundeven %15 : vector<8x128xf32>
    %17 = arith.truncf %16 : vector<8x128xf32> to vector<8x128xbf16>
    %c0_10 = arith.constant 0 : index
    %c0_11 = arith.constant 0 : index
    %18 = vector.load %arg4[%c0_10, %c0_11] : memref<128x128xbf16, #tpu.memory_space<vmem>>, vector<128x128xbf16>
    %cst_12 = arith.constant dense<0.000000e+00> : vector<8x128xf32>
    %19 = tpu.matmul %17, %18, %cst_12 {dimension_numbers = #tpu.dot_dimension_numbers<[1], [0], [0], [1], [0, 0, 1, 1], [], []>} : vector<8x128xbf16>, vector<128x128xbf16>, vector<8x128xf32> -> vector<8x128xf32>
    %c0_13 = arith.constant 0 : index
    %c0_14 = arith.constant 0 : index
    %20 = vector.load %arg5[%c0_13, %c0_14] : memref<1x128xf32, #tpu.memory_space<vmem>>, vector<1x128xf32>
    %21 = vector.broadcast %20 : vector<1x128xf32> to vector<8x128xf32>
    %22 = arith.addf %19, %21 : vector<8x128xf32>
    %c0_15 = arith.constant 0 : index
    %c0_16 = arith.constant 0 : index
    %23 = vector.load %arg6[%c0_15, %c0_16] : memref<8x128xf32, #tpu.memory_space<vmem>>, vector<8x128xf32>
    tpu.vector_store %arg6[%c0_15, %c0_16], %22 {strides = array<i32>} : memref<8x128xf32, #tpu.memory_space<vmem>>, vector<8x128xf32>,
    return
  }
  func.func @transform_0(%arg0: i32) -> (i32, i32) {
    %c0_i32 = arith.constant 0 : i32
    %c0_i32_0 = arith.constant 0 : i32
    return %arg0, %c0_i32 : i32, i32
  }
  func.func @transform_1(%arg0: i32) -> (i32, i32) {
    %c0_i32 = arith.constant 0 : i32
    %c0_i32_0 = arith.constant 0 : i32
    %c0_i32_1 = arith.constant 0 : i32
    return %c0_i32, %c0_i32_0 : i32, i32
  }
  func.func @transform_2(%arg0: i32) -> (i32, i32) {
    %c0_i32 = arith.constant 0 : i32
    %c0_i32_0 = arith.constant 0 : i32
    %c0_i32_1 = arith.constant 0 : i32
    return %c0_i32, %c0_i32_0 : i32, i32
  }
  func.func @transform_3(%arg0: i32) -> (i32, i32) {
    %c0_i32 = arith.constant 0 : i32
    %c0_i32_0 = arith.constant 0 : i32
    %c0_i32_1 = arith.constant 0 : i32
    return %c0_i32, %c0_i32_0 : i32, i32
  }
  func.func @transform_4(%arg0: i32) -> (i32, i32) {
    %c0_i32 = arith.constant 0 : i32
    %c0_i32_0 = arith.constant 0 : i32
    %c0_i32_1 = arith.constant 0 : i32
    return %c0_i32, %c0_i32_0 : i32, i32
  }
  func.func @transform_5(%arg0: i32) -> (i32, i32) {
    %c0_i32 = arith.constant 0 : i32
    %c0_i32_0 = arith.constant 0 : i32
    return %arg0, %c0_i32 : i32, i32
  }
}

module attributes {stable_mosaic.version = 11 : i64} {
  func.func @_mlp_kernel(%arg0: i32, %arg1: memref<8x32xf32, #tpu.memory_space<vmem>>, %arg2: memref<32x128xbf16, #tpu.memory_space<vmem>>, %arg3: memref<128x128xbf16, #tpu.memory_space<vmem>>, %arg4: memref<128x128xbf16, #tpu.memory_space<vmem>>, %arg5: memref<1x128xf32, #tpu.memory_space<vmem>>, %arg6: memref<8x128xf32, #tpu.memory_space<vmem>>) attributes {dimension_semantics = [#tpu.dimension_semantics<parallel>], iteration_bounds = array<i64: 2>, scalar_prefetch = 0 : i64, scratch_operands = 0 : i64, tpu.core_type = #tpu.core_type<tc>, window_params = [{transform_indices = @transform_0, window_bounds = array<i64: 8, 32>}, {pipeline_mode = #tpu.pipeline_mode<synchronous>, transform_indices = @transform_1, window_bounds = array<i64: 32, 128>}, {pipeline_mode = #tpu.pipeline_mode<synchronous>, transform_indices = @transform_2, window_bounds = array<i64: 128, 128>}, {pipeline_mode = #tpu.pipeline_mode<synchronous>, transform_indices = @transform_3, window_bounds = array<i64: 128, 128>}, {pipeline_mode = #tpu.pipeline_mode<synchronous>, transform_indices = @transform_4, window_bounds = array<i64: 1, 128>}, {transform_indices = @transform_5, window_bounds = array<i64: 8, 128>}]} {
    %c0 = arith.constant 0 : index
    %c0_0 = arith.constant 0 : index
    %0 = vector.load %arg1[%c0, %c0_0] : memref<8x32xf32, #tpu.memory_space<vmem>>, vector<8x32xf32>
    %1 = arith.truncf %0 : vector<8x32xf32> to vector<8x32xbf16>
    %c0_1 = arith.constant 0 : index
    %c0_2 = arith.constant 0 : index
    %2 = vector.load %arg2[%c0_1, %c0_2] : memref<32x128xbf16, #tpu.memory_space<vmem>>, vector<32x128xbf16>
    %cst = arith.constant dense<0.000000e+00> : vector<8x128xf32>
    %3 = tpu.matmul %1, %2, %cst {dimension_numbers = #tpu.dot_dimension_numbers<[1], [0], [0], [1], [0, 0, 1, 1], [], []>} : vector<8x32xbf16>, vector<32x128xbf16>, vector<8x128xf32> -> vector<8x128xf32>
    %cst_3 = arith.constant 0.000000e+00 : f32
    %cst_4 = arith.constant 4.000000e+00 : f32
    %4 = vector.broadcast %cst_3 : f32 to vector<8x128xf32>
    %5 = arith.maximumf %4, %3 : vector<8x128xf32>
    %6 = vector.broadcast %cst_4 : f32 to vector<8x128xf32>
    %7 = arith.minimumf %6, %5 : vector<8x128xf32>
    %8 = math.roundeven %7 : vector<8x128xf32>
    %9 = arith.truncf %8 : vector<8x128xf32> to vector<8x128xbf16>
    %c0_5 = arith.constant 0 : index
    %c0_6 = arith.constant 0 : index
    %10 = vector.load %arg3[%c0_5, %c0_6] : memref<128x128xbf16, #tpu.memory_space<vmem>>, vector<128x128xbf16>
    %cst_7 = arith.constant dense<0.000000e+00> : vector<8x128xf32>
    %11 = tpu.matmul %9, %10, %cst_7 {dimension_numbers = #tpu.dot_dimension_numbers<[1], [0], [0], [1], [0, 0, 1, 1], [], []>} : vector<8x128xbf16>, vector<128x128xbf16>, vector<8x128xf32> -> vector<8x128xf32>
    %cst_8 = arith.constant 0.000000e+00 : f32
    %cst_9 = arith.constant 4.000000e+00 : f32
    %12 = vector.broadcast %cst_8 : f32 to vector<8x128xf32>
    %13 = arith.maximumf %12, %11 : vector<8x128xf32>
    %14 = vector.broadcast %cst_9 : f32 to vector<8x128xf32>
    %15 = arith.minimumf %14, %13 : vector<8x128xf32>
    %16 = math.roundeven %15 : vector<8x128xf32>
    %17 = arith.truncf %16 : vector<8x128xf32> to vector<8x128xbf16>
    %c0_10 = arith.constant 0 : index
    %c0_11 = arith.constant 0 : index
    %18 = vector.load %arg4[%c0_10, %c0_11] : memref<128x128xbf16, #tpu.memory_space<vmem>>, vector<128x128xbf16>
    %cst_12 = arith.constant dense<0.000000e+00> : vector<8x128xf32>
    %19 = tpu.matmul %17, %18, %cst_12 {dimension_numbers = #tpu.dot_dimension_numbers<[1], [0], [0], [1], [0, 0, 1, 1], [], []>} : vector<8x128xbf16>, vector<128x128xbf16>, vector<8x128xf32> -> vector<8x128xf32>
    %c0_13 = arith.constant 0 : index
    %c0_14 = arith.constant 0 : index
    %20 = vector.load %arg5[%c0_13, %c0_14] : memref<1x128xf32, #tpu.memory_space<vmem>>, vector<1x128xf32>
    %21 = vector.broadcast %20 : vector<1x128xf32> to vector<8x128xf32>
    %22 = arith.addf %19, %21 : vector<8x128xf32>
    %c0_15 = arith.constant 0 : index
    %c0_16 = arith.constant 0 : index
    %23 = vector.load %arg6[%c0_15, %c0_16] : memref<8x128xf32, #tpu.memory_space<vmem>>, vector<8x128xf32>
    tpu.vector_store %arg6[%c0_15, %c0_16], %22 {strides = array<i32>} : memref<8x128xf32, #tpu.memory_space<vmem>>, vector<8x128xf32>,
    return
  }
  func.func @transform_0(%arg0: i32) -> (i32, i32) {
    %c0_i32 = arith.constant 0 : i32
    %c0_i32_0 = arith.constant 0 : i32
    return %arg0, %c0_i32 : i32, i32
  }
  func.func @transform_1(%arg0: i32) -> (i32, i32) {
    %c0_i32 = arith.constant 0 : i32
    %c0_i32_0 = arith.constant 0 : i32
    %c0_i32_1 = arith.constant 0 : i32
    return %c0_i32, %c0_i32_0 : i32, i32
  }
  func.func @transform_2(%arg0: i32) -> (i32, i32) {
    %c0_i32 = arith.constant 0 : i32
    %c0_i32_0 = arith.constant 0 : i32
    %c0_i32_1 = arith.constant 0 : i32
    return %c0_i32, %c0_i32_0 : i32, i32
  }
  func.func @transform_3(%arg0: i32) -> (i32, i32) {
    %c0_i32 = arith.constant 0 : i32
    %c0_i32_0 = arith.constant 0 : i32
    %c0_i32_1 = arith.constant 0 : i32
    return %c0_i32, %c0_i32_0 : i32, i32
  }
  func.func @transform_4(%arg0: i32) -> (i32, i32) {
    %c0_i32 = arith.constant 0 : i32
    %c0_i32_0 = arith.constant 0 : i32
    %c0_i32_1 = arith.constant 0 : i32
    return %c0_i32, %c0_i32_0 : i32, i32
  }
  func.func @transform_5(%arg0: i32) -> (i32, i32) {
    %c0_i32 = arith.constant 0 : i32
    %c0_i32_0 = arith.constant 0 : i32
    return %arg0, %c0_i32 : i32, i32
  }
}

</mosaic_0001>

<llo_original>
// kernel: tpu_custom_call.1
$region0: #{tpu_custom_call.1}
  #allocation0 [shape = 'u32[]', space=smem, size = 0x4, offset = 0x4, fixed_abs, tag = 'smem constant byte address 0x4 - core index']
  #allocation1 [shape = 'u32[72,128]{1,0:T(1,128)}', space=vmem, size = 0x9000, scoped, tag = 'internal scratch']
  %s0 = inlined_call_operand.hbm [shape: f32[16,32], index: 0, kind: input, shape index: {}]
  %s1 = inlined_call_operand.hbm [shape: bf16[32,128], index: 1, kind: input, shape index: {}]
  %s2 = inlined_call_operand.hbm [shape: bf16[128,128], index: 2, kind: input, shape index: {}]
  %s3 = inlined_call_operand.hbm [shape: bf16[128,128], index: 3, kind: input, shape index: {}]
  %s4 = inlined_call_operand.vmem [shape: f32[1,128], index: 4, kind: input, shape index: {}]
  %s5 = inlined_call_operand.hbm [shape: f32[16,128], index: 5, kind: output, shape index: {}]
  %s6 = sld [smem:[#allocation0]]
  $region69: #{tpu_custom_call.1} parent=0
    _
  %s8 = ssub.s32 1, %s6
  %s9 = scalar_select 0, %s8, %s6
  $region1: #{tpu_custom_call.1} parent=0
    #allocation2 [shape = 'u8[8192]{0}', space=vmem, size = 0x2000, scoped, tag = 'input window, operand 0']
    #allocation3 [shape = 's32[2]{0}', space=sflag, size = 0x8, scoped, tag = 'scoped memory for tpu_custom_call.1']
    #allocation4 [shape = 's32[2]{0}', space=sflag, size = 0x8, scoped, tag = 'scoped memory for tpu_custom_call.1']
    #allocation5 [shape = 'u8[8192]{0}', space=vmem, size = 0x2000, scoped, tag = 'input window, operand 1, single buffered']
    #allocation6 [shape = 's32[1]{0}', space=sflag, size = 0x4, scoped, tag = 'scoped memory for tpu_custom_call.1']
    #allocation7 [shape = 'u8[32768]{0}', space=vmem, size = 0x8000, scoped, tag = 'input window, operand 2, single buffered']
    #allocation8 [shape = 'u8[32768]{0}', space=vmem, size = 0x8000, scoped, tag = 'input window, operand 3, single buffered']
    #allocation9 [shape = 's32[1]{0}', space=sflag, size = 0x4, scoped, tag = 'scoped memory for tpu_custom_call.1']
    #allocation10 [shape = 'u8[8192]{0}', space=vmem, size = 0x2000, scoped, tag = 'output window, operand 0']
    %10 = vsyncpa [#allocation3], 0
    %s11 = scalar_lea.sflag [#allocation3], 1
    %12 = vsyncpa %s11, 0
    %13 = vsyncpa [#allocation6], 0
    %14 = vsyncpa [#allocation9], 0
    %15 = vsyncpa [#allocation4], 0
    %s16 = scalar_lea.sflag [#allocation4], 1
    %17 = vsyncpa %s16, 0
    loop: start=0, step=1, limit=4
    $region2: #{tpu_custom_call.1} parent=1 // loop_pre_header
      _
    $region3: #{tpu_custom_call.1} parent=1 // loop_header
      %s19 = sphi 0, %s23
      %p20 = scmp.ge.s32.totalorder %s19, 4
      %s29 = sphi 0, %s31
      %s32 = sphi 0, %s29
      %s33 = sphi 0, %s32
      %s49 = sphi 0, %s33
      %s53 = sphi 0, %s53
      %s55 = sphi 0, %s53
      %s56 = sphi 0, %s55
      %s70 = sphi 0, %s56
      %s74 = sphi 0, %s74
      %s76 = sphi 0, %s74
      %s77 = sphi 0, %s76
      %s91 = sphi 0, %s77
      %s95 = sphi 0, %s95
      %s97 = sphi 0, %s95
      %s98 = sphi 0, %s97
      %s112 = sphi 0, %s98
      %s116 = sphi 0, %s116
      %s118 = sphi 0, %s116
      %s119 = sphi 0, %s118
      %s133 = sphi 0, %s119
      %s139 = sphi 0, %s141
      %s142 = sphi 0, %s139
      %s143 = sphi 0, %s142
      %s159 = sphi 0, %s143
    $region4: #{tpu_custom_call.1} parent=1 // loop_header_branch
      %22 = sbr.rel (%p20) target = $region8
    $region5: #{tpu_custom_call.1} parent=1 // loop_body
      %s24 = ssub.s32 %s19, 1
      %s25 = ssub.s32 %s19, 2
      %s26 = sadd.s32 %s19, 1
      %s27 = ssub.s32 %s19, %s26
      %p28 = scmp.eq.s32.totalorder %s27, 0
      %s30 = sadd.s32 %s29, 1
      %s31 = scalar_select %p28, %s29, %s30
      %p34 = pneg %p28
      %p35 = scmp.eq.s32.totalorder %s19, 1
      %p36 = por %p34, %p35
      %p37 = scmp.ne.s32.totalorder %s29, %s32
      %p38 = scmp.eq.s32.totalorder %s19, 0
      %p39 = por %p37, %p38
      %p40 = scmp.ne.s32.totalorder %s29, %s32
      %p41 = scmp.eq.s32.totalorder %s24, 1
      %p42 = por %p40, %p41
      %p43 = scmp.ne.s32.totalorder %s32, %s33
      %p44 = scmp.eq.s32.totalorder %s24, 0
      %p45 = por %p43, %p44
      %p46 = scmp.ne.s32.totalorder %s32, %s33
      %p47 = scmp.eq.s32.totalorder %s25, 1
      %p48 = por %p46, %p47
      %p50 = scmp.ne.s32.totalorder %s33, %s49
      %p51 = scmp.eq.s32.totalorder %s25, 0
      %p52 = por %p50, %p51
      %s54 = sadd.s32 %s53, 1
      %p57 = scmp.eq.s32.totalorder %s19, 1
      %p58 = scmp.ne.s32.totalorder %s53, %s55
      %p59 = scmp.eq.s32.totalorder %s19, 0
      %p60 = por %p58, %p59
      %p61 = scmp.ne.s32.totalorder %s53, %s55
      %p62 = scmp.eq.s32.totalorder %s24, 1
      %p63 = por %p61, %p62
      %p64 = scmp.ne.s32.totalorder %s55, %s56
      %p65 = scmp.eq.s32.totalorder %s24, 0
      %p66 = por %p64, %p65
      %p67 = scmp.ne.s32.totalorder %s55, %s56
      %p68 = scmp.eq.s32.totalorder %s25, 1
      %p69 = por %p67, %p68
      %p71 = scmp.ne.s32.totalorder %s56, %s70
      %p72 = scmp.eq.s32.totalorder %s25, 0
      %p73 = por %p71, %p72
      %s75 = sadd.s32 %s74, 1
      %p78 = scmp.eq.s32.totalorder %s19, 1
      %p79 = scmp.ne.s32.totalorder %s74, %s76
      %p80 = scmp.eq.s32.totalorder %s19, 0
      %p81 = por %p79, %p80
      %p82 = scmp.ne.s32.totalorder %s74, %s76
      %p83 = scmp.eq.s32.totalorder %s24, 1
      %p84 = por %p82, %p83
      %p85 = scmp.ne.s32.totalorder %s76, %s77
      %p86 = scmp.eq.s32.totalorder %s24, 0
      %p87 = por %p85, %p86
      %p88 = scmp.ne.s32.totalorder %s76, %s77
      %p89 = scmp.eq.s32.totalorder %s25, 1
      %p90 = por %p88, %p89
      %p92 = scmp.ne.s32.totalorder %s77, %s91
      %p93 = scmp.eq.s32.totalorder %s25, 0
      %p94 = por %p92, %p93
      %s96 = sadd.s32 %s95, 1
      %p99 = scmp.eq.s32.totalorder %s19, 1
      %p100 = scmp.ne.s32.totalorder %s95, %s97
      %p101 = scmp.eq.s32.totalorder %s19, 0
      %p102 = por %p100, %p101
      %p103 = scmp.ne.s32.totalorder %s95, %s97
      %p104 = scmp.eq.s32.totalorder %s24, 1
      %p105 = por %p103, %p104
      %p106 = scmp.ne.s32.totalorder %s97, %s98
      %p107 = scmp.eq.s32.totalorder %s24, 0
      %p108 = por %p106, %p107
      %p109 = scmp.ne.s32.totalorder %s97, %s98
      %p110 = scmp.eq.s32.totalorder %s25, 1
      %p111 = por %p109, %p110
      %p113 = scmp.ne.s32.totalorder %s98, %s112
      %p114 = scmp.eq.s32.totalorder %s25, 0
      %p115 = por %p113, %p114
      %s117 = sadd.s32 %s116, 1
      %p120 = scmp.eq.s32.totalorder %s19, 1
      %p121 = scmp.ne.s32.totalorder %s116, %s118
      %p122 = scmp.eq.s32.totalorder %s19, 0
      %p123 = por %p121, %p122
      %p124 = scmp.ne.s32.totalorder %s116, %s118
      %p125 = scmp.eq.s32.totalorder %s24, 1
      %p126 = por %p124, %p125
      %p127 = scmp.ne.s32.totalorder %s118, %s119
      %p128 = scmp.eq.s32.totalorder %s24, 0
      %p129 = por %p127, %p128
      %p130 = scmp.ne.s32.totalorder %s118, %s119
      %p131 = scmp.eq.s32.totalorder %s25, 1
      %p132 = por %p130, %p131
      %p134 = scmp.ne.s32.totalorder %s119, %s133
      %p135 = scmp.eq.s32.totalorder %s25, 0
      %p136 = por %p134, %p135
      %s137 = ssub.s32 %s19, %s26
      %p138 = scmp.eq.s32.totalorder %s137, 0
      %s140 = sadd.s32 %s139, 1
      %s141 = scalar_select %p138, %s139, %s140
      %p144 = pneg %p138
      %p145 = scmp.eq.s32.totalorder %s19, 1
      %p146 = por %p144, %p145
      %p147 = scmp.ne.s32.totalorder %s139, %s142
      %p148 = scmp.eq.s32.totalorder %s19, 0
      %p149 = por %p147, %p148
      %p150 = scmp.ne.s32.totalorder %s139, %s142
      %p151 = scmp.eq.s32.totalorder %s24, 1
      %p152 = por %p150, %p151
      %p153 = scmp.ne.s32.totalorder %s142, %s143
      %p154 = scmp.eq.s32.totalorder %s24, 0
      %p155 = por %p153, %p154
      %p156 = scmp.ne.s32.totalorder %s142, %s143
      %p157 = scmp.eq.s32.totalorder %s25, 1
      %p158 = por %p156, %p157
      %p160 = scmp.ne.s32.totalorder %s143, %s159
      %p161 = scmp.eq.s32.totalorder %s25, 0
      %p162 = por %p160, %p161
      %p163 = scmp.le.s32.totalorder 1, %s19
      %p164 = scmp.lt.s32.totalorder %s19, 3
      %p165 = pnand %p163, %p164
      %p166 = pneg %p165
      // Predicated region
      $region9: #{tpu_custom_call.1} parent=5 // pred_check
        _
      $region10: #{tpu_custom_call.1} parent=5 // pred_check_branch
        %168 = sbr.rel (%p165) target = $region12
      $region11: #{tpu_custom_call.1} parent=5 // pred_region
        %s169 = ssub.s32 %s19, 1
        // Predicated region
        $region13: #{tpu_custom_call.1} parent=11 // pred_check
          %p170 = pneg %p66
        $region14: #{tpu_custom_call.1} parent=11 // pred_check_branch
          %172 = sbr.rel (%p170) target = $region16
        $region15: #{tpu_custom_call.1} parent=11 // pred_region
          %174 = vsyncadd [#allocation6], 0
          %s175 = sshll.u32 %s1, 4
          %s176 = int_to_ptr.hbm [resolvable:$true] %s175
          %s177 = sshll.u32 [#allocation5], 4
          %s178 = int_to_ptr.vmem [resolvable:$true] %s177
          %183 = dma.hbm_to_vmem [thread:$0]  %s176, 256, %s178, [#allocation6], 64, 64, 4
        $region16: #{tpu_custom_call.1} parent=11 // pred_fallthru
          _
        // Predicated region
        $region17: #{tpu_custom_call.1} parent=11 // pred_check
          %p184 = pneg %p87
        $region18: #{tpu_custom_call.1} parent=11 // pred_check_branch
          %186 = sbr.rel (%p184) target = $region20
        $region19: #{tpu_custom_call.1} parent=11 // pred_region
          %188 = vsyncadd [#allocation6], 0
          %s189 = sshll.u32 %s2, 4
          %s190 = int_to_ptr.hbm [resolvable:$true] %s189
          %s191 = sshll.u32 [#allocation7], 4
          %s192 = int_to_ptr.vmem [resolvable:$true] %s191
          %197 = dma.hbm_to_vmem [thread:$0]  %s190, 1024, %s192, [#allocation6], 64, 64, 4
        $region20: #{tpu_custom_call.1} parent=11 // pred_fallthru
          _
        // Predicated region
        $region21: #{tpu_custom_call.1} parent=11 // pred_check
          %p198 = pneg %p108
        $region22: #{tpu_custom_call.1} parent=11 // pred_check_branch
          %200 = sbr.rel (%p198) target = $region24
        $region23: #{tpu_custom_call.1} parent=11 // pred_region
          %202 = vsyncadd [#allocation9], 0
          %s203 = sshll.u32 %s3, 4
          %s204 = int_to_ptr.hbm [resolvable:$true] %s203
          %s205 = sshll.u32 [#allocation8], 4
          %s206 = int_to_ptr.vmem [resolvable:$true] %s205
          %211 = dma.hbm_to_vmem [thread:$0]  %s204, 1024, %s206, [#allocation9], 64, 64, 4
        $region24: #{tpu_custom_call.1} parent=11 // pred_fallthru
          _
        // Predicated region
        $region25: #{tpu_custom_call.1} parent=11 // pred_check
          %p212 = pneg %p129
        $region26: #{tpu_custom_call.1} parent=11 // pred_check_branch
          %214 = sbr.rel (%p212) target = $region28
        $region27: #{tpu_custom_call.1} parent=11 // pred_region
          _
        $region28: #{tpu_custom_call.1} parent=11 // pred_fallthru
          _
      $region12: #{tpu_custom_call.1} parent=5 // pred_fallthru
        _
      %p215 = scmp.lt.s32.totalorder %s19, 2
      // Predicated region
      $region29: #{tpu_custom_call.1} parent=5 // pred_check
        %p216 = pneg %p215
      $region30: #{tpu_custom_call.1} parent=5 // pred_check_branch
        %218 = sbr.rel (%p216) target = $region32
      $region31: #{tpu_custom_call.1} parent=5 // pred_region
        // Predicated region
        $region33: #{tpu_custom_call.1} parent=31 // pred_check
          %p219 = pneg %p39
        $region34: #{tpu_custom_call.1} parent=31 // pred_check_branch
          %221 = sbr.rel (%p219) target = $region36
        $region35: #{tpu_custom_call.1} parent=31 // pred_region
          %s222 = sand.u32 %s29, 1
          %s223 = scalar_lea.sflag [#allocation3], %s222
          %s224 = sand.u32 %s29, 1
          %s225 = smul.addr %s224, 8
          %s226 = scalar_lea.vmem [#allocation2], %s225
          %228 = vsyncadd %s223, 0
          %s229 = smul.addr %s19, 8
          %s230 = scalar_lea.hbm %s0, %s229
          %s232 = sshll.u32 %s230, 4
          %s233 = int_to_ptr.hbm [resolvable:$true] %s232
          %s234 = sshll.u32 %s226, 4
          %s235 = int_to_ptr.vmem [resolvable:$true] %s234
          %237 = dma.hbm_to_vmem [thread:$0]  %s233, 128, %s235, %s223
        $region36: #{tpu_custom_call.1} parent=31 // pred_fallthru
          _
      $region32: #{tpu_custom_call.1} parent=5 // pred_fallthru
        _
      %p238 = scmp.le.s32.totalorder 1, %s19
      %p239 = scmp.lt.s32.totalorder %s19, 3
      %p240 = pnand %p238, %p239
      %p241 = pneg %p240
      // Predicated region
      $region37: #{tpu_custom_call.1} parent=5 // pred_check
        _
      $region38: #{tpu_custom_call.1} parent=5 // pred_check_branch
        %243 = sbr.rel (%p240) target = $region40
      $region39: #{tpu_custom_call.1} parent=5 // pred_region
        %s244 = ssub.s32 %s19, 1
        %s245 = sand.u32 %s32, 1
        %s246 = scalar_lea.sflag [#allocation3], %s245
        %s247 = sand.u32 %s32, 1
        %s248 = smul.addr %s247, 8
        %s249 = scalar_lea.vmem [#allocation2], %s248
        // Predicated region
        $region41: #{tpu_custom_call.1} parent=39 // pred_check
          %p250 = pneg %p45
        $region42: #{tpu_custom_call.1} parent=39 // pred_check_branch
          %252 = sbr.rel (%p250) target = $region44
        $region43: #{tpu_custom_call.1} parent=39 // pred_region
          %254 = dma.done %s246, 128
        $region44: #{tpu_custom_call.1} parent=39 // pred_fallthru
          _
        // Predicated region
        $region45: #{tpu_custom_call.1} parent=39 // pred_check
          %p255 = pneg %p66
        $region46: #{tpu_custom_call.1} parent=39 // pred_check_branch
          %257 = sbr.rel (%p255) target = $region48
        $region47: #{tpu_custom_call.1} parent=39 // pred_region
          %259 = dma.done [#allocation6], 256
        $region48: #{tpu_custom_call.1} parent=39 // pred_fallthru
          _
        // Predicated region
        $region49: #{tpu_custom_call.1} parent=39 // pred_check
          %p260 = pneg %p87
        $region50: #{tpu_custom_call.1} parent=39 // pred_check_branch
          %262 = sbr.rel (%p260) target = $region52
        $region51: #{tpu_custom_call.1} parent=39 // pred_region
          %264 = dma.done [#allocation6], 1024
        $region52: #{tpu_custom_call.1} parent=39 // pred_fallthru
          _
        // Predicated region
        $region53: #{tpu_custom_call.1} parent=39 // pred_check
          %p265 = pneg %p108
        $region54: #{tpu_custom_call.1} parent=39 // pred_check_branch
          %267 = sbr.rel (%p265) target = $region56
        $region55: #{tpu_custom_call.1} parent=39 // pred_region
          %269 = dma.done [#allocation9], 1024
        $region56: #{tpu_custom_call.1} parent=39 // pred_fallthru
          _
        %s270 = sand.u32 %s32, 1
        %s271 = scalar_lea.sflag [#allocation3], %s270
        %s272 = sand.u32 %s32, 1
        %s273 = smul.addr %s272, 8
        %s274 = scalar_lea.vmem [#allocation2], %s273
        %p275 = pneg %p45
        %p276 = pneg %p42
        %p277 = pneg %p66
        %p278 = pneg %p63
        %p279 = pneg %p87
        %p280 = pneg %p84
        %p281 = pneg %p108
        %p282 = pneg %p105
        %p283 = pneg %p129
        %p284 = pneg %p126
        %p285 = pneg %p155
        %p286 = pneg %p152
        %s287 = sand.u32 %s142, 1
        %s288 = scalar_lea.sflag [#allocation4], %s287
        %s289 = sand.u32 %s142, 1
        %s290 = smul.addr %s289, 8
        %s291 = scalar_lea.vmem [#allocation10], %s290
        %v293 = vld [vmem:[%s249] sm:$0xff]
        %v294 = vpack.c.bf16 %v293, %v293
        %v295 = vld [vmem:[#allocation5] sm:$0xf]
        %v296 = vld [vmem:[#allocation5 + $0x4] sm:$0xf]
        %v297 = vld [vmem:[#allocation5 + $0x8] sm:$0xf]
        %v298 = vld [vmem:[#allocation5 + $0xc] sm:$0xf]
        %v303 = vunpack.c.l.b16 %v295
        %v304 = vunpack.c.l.b16 %v296
        %v305 = vunpack.c.l.b16 %v297
        %v306 = vunpack.c.l.b16 %v298
        %v307 = vpack.c.b16 %v304, %v303
        %v308 = vpack.c.b16 %v306, %v305
        %vm311 = vcmask 261120
        %v313 = vsel %vm311, %v294, 0
        %315 = vmatpush.bf16.msra.mxu0 0
        %316 = vmatpush.bf16.msra.mxu0 0
        %317 = vmatpush.bf16.msra.mxu0 0
        %318 = vmatpush.bf16.msra.mxu0 0
        %319 = vmatpush.bf16.msra.mxu0 0
        %320 = vmatpush.bf16.msra.mxu0 0
        %321 = vmatpush.bf16.msra.mxu0 %v308
        %322 = vmatpush.bf16.msra.mxu0 %v307
        %323 = vmatmul.bf16.gmra.mxu0 %v313
        %v324 = vpop.f32.mrf.mxu0
        %v325 = vadd.f32 0.0, %v324
        %v326 = vpop.f32.mrf.mxu0
        %327 = vdwg.mxu0
        %v328 = vmax.f32 %v325, 0.0
        %v329 = vmin.f32 %v328, 4.0
        %v330 = vround.ne.pseudo %v329
        %v331 = vpack.c.bf16 %v330, %v330
        %v332 = vld [vmem:[#allocation7] sm:$0xf]
        %v333 = vld [vmem:[#allocation7 + $0x4] sm:$0xf]
        %v334 = vld [vmem:[#allocation7 + $0x8] sm:$0xf]
        %v335 = vld [vmem:[#allocation7 + $0xc] sm:$0xf]
        %v336 = vld [vmem:[#allocation7 + $0x10] sm:$0xf]
        %v337 = vld [vmem:[#allocation7 + $0x14] sm:$0xf]
        %v338 = vld [vmem:[#allocation7 + $0x18] sm:$0xf]
        %v339 = vld [vmem:[#allocation7 + $0x1c] sm:$0xf]
        %v340 = vld [vmem:[#allocation7 + $0x20] sm:$0xf]
        %v341 = vld [vmem:[#allocation7 + $0x24] sm:$0xf]
        %v342 = vld [vmem:[#allocation7 + $0x28] sm:$0xf]
        %v343 = vld [vmem:[#allocation7 + $0x2c] sm:$0xf]
        %v344 = vld [vmem:[#allocation7 + $0x30] sm:$0xf]
        %v345 = vld [vmem:[#allocation7 + $0x34] sm:$0xf]
        %v346 = vld [vmem:[#allocation7 + $0x38] sm:$0xf]
        %v347 = vld [vmem:[#allocation7 + $0x3c] sm:$0xf]
        %v364 = vunpack.c.l.b16 %v332
        %v365 = vunpack.c.l.b16 %v333
        %v366 = vunpack.c.l.b16 %v334
        %v367 = vunpack.c.l.b16 %v335
        %v368 = vunpack.c.l.b16 %v336
        %v369 = vunpack.c.l.b16 %v337
        %v370 = vunpack.c.l.b16 %v338
        %v371 = vunpack.c.l.b16 %v339
        %v372 = vunpack.c.l.b16 %v340
        %v373 = vunpack.c.l.b16 %v341
        %v374 = vunpack.c.l.b16 %v342
        %v375 = vunpack.c.l.b16 %v343
        %v376 = vunpack.c.l.b16 %v344
        %v377 = vunpack.c.l.b16 %v345
        %v378 = vunpack.c.l.b16 %v346
        %v379 = vunpack.c.l.b16 %v347
        %v380 = vpack.c.b16 %v365, %v364
        %v381 = vpack.c.b16 %v367, %v366
        %v382 = vpack.c.b16 %v369, %v368
        %v383 = vpack.c.b16 %v371, %v370
        %v384 = vpack.c.b16 %v373, %v372
        %v385 = vpack.c.b16 %v375, %v374
        %v386 = vpack.c.b16 %v377, %v376
        %v387 = vpack.c.b16 %v379, %v378
        %396 = vmatpush.bf16.msra.mxu0 %v387
        %397 = vmatpush.bf16.msra.mxu0 %v386
        %398 = vmatpush.bf16.msra.mxu0 %v385
        %399 = vmatpush.bf16.msra.mxu0 %v384
        %400 = vmatpush.bf16.msra.mxu0 %v383
        %401 = vmatpush.bf16.msra.mxu0 %v382
        %402 = vmatpush.bf16.msra.mxu0 %v381
        %403 = vmatpush.bf16.msra.mxu0 %v380
        %404 = vmatmul.bf16.gmra.mxu0 %v331
        %v405 = vpop.f32.mrf.mxu0
        %v406 = vadd.f32 0.0, %v405
        %v407 = vpop.f32.mrf.mxu0
        %408 = vdwg.mxu0
        %v409 = vmax.f32 %v406, 0.0
        %v410 = vmin.f32 %v409, 4.0
        %v411 = vround.ne.pseudo %v410
        %v412 = vpack.c.bf16 %v411, %v411
        %v413 = vld [vmem:[#allocation8] sm:$0xf]
        %v414 = vld [vmem:[#allocation8 + $0x4] sm:$0xf]
        %v415 = vld [vmem:[#allocation8 + $0x8] sm:$0xf]
        %v416 = vld [vmem:[#allocation8 + $0xc] sm:$0xf]
        %v417 = vld [vmem:[#allocation8 + $0x10] sm:$0xf]
        %v418 = vld [vmem:[#allocation8 + $0x14] sm:$0xf]
        %v419 = vld [vmem:[#allocation8 + $0x18] sm:$0xf]
        %v420 = vld [vmem:[#allocation8 + $0x1c] sm:$0xf]
        %v421 = vld [vmem:[#allocation8 + $0x20] sm:$0xf]
        %v422 = vld [vmem:[#allocation8 + $0x24] sm:$0xf]
        %v423 = vld [vmem:[#allocation8 + $0x28] sm:$0xf]
        %v424 = vld [vmem:[#allocation8 + $0x2c] sm:$0xf]
        %v425 = vld [vmem:[#allocation8 + $0x30] sm:$0xf]
        %v426 = vld [vmem:[#allocation8 + $0x34] sm:$0xf]
        %v427 = vld [vmem:[#allocation8 + $0x38] sm:$0xf]
        %v428 = vld [vmem:[#allocation8 + $0x3c] sm:$0xf]
        %v429 = vld [vmem:[%s4] sm:$0x1]
        %v431 = vperm.slane %v429, 0
        %v449 = vunpack.c.l.b16 %v413
        %v450 = vunpack.c.l.b16 %v414
        %v451 = vunpack.c.l.b16 %v415
        %v452 = vunpack.c.l.b16 %v416
        %v453 = vunpack.c.l.b16 %v417
        %v454 = vunpack.c.l.b16 %v418
        %v455 = vunpack.c.l.b16 %v419
        %v456 = vunpack.c.l.b16 %v420
        %v457 = vunpack.c.l.b16 %v421
        %v458 = vunpack.c.l.b16 %v422
        %v459 = vunpack.c.l.b16 %v423
        %v460 = vunpack.c.l.b16 %v424
        %v461 = vunpack.c.l.b16 %v425
        %v462 = vunpack.c.l.b16 %v426
        %v463 = vunpack.c.l.b16 %v427
        %v464 = vunpack.c.l.b16 %v428
        %v465 = vpack.c.b16 %v450, %v449
        %v466 = vpack.c.b16 %v452, %v451
        %v467 = vpack.c.b16 %v454, %v453
        %v468 = vpack.c.b16 %v456, %v455
        %v469 = vpack.c.b16 %v458, %v457
        %v470 = vpack.c.b16 %v460, %v459
        %v471 = vpack.c.b16 %v462, %v461
        %v472 = vpack.c.b16 %v464, %v463
        %481 = vmatpush.bf16.msra.mxu0 %v472
        %482 = vmatpush.bf16.msra.mxu0 %v471
        %483 = vmatpush.bf16.msra.mxu0 %v470
        %484 = vmatpush.bf16.msra.mxu0 %v469
        %485 = vmatpush.bf16.msra.mxu0 %v468
        %486 = vmatpush.bf16.msra.mxu0 %v467
        %487 = vmatpush.bf16.msra.mxu0 %v466
        %488 = vmatpush.bf16.msra.mxu0 %v465
        %489 = vmatmul.bf16.gmra.mxu0 %v412
        %v490 = vpop.f32.mrf.mxu0
        %v491 = vadd.f32 %v431, %v490
        %v492 = vpop.f32.mrf.mxu0
        %493 = vdwg.mxu0
        %494 = vst [vmem:[%s291] sm:$0xff] %v491
        %s495 = sand.u32 %s142, 1
        %s496 = scalar_lea.sflag [#allocation4], %s495
        %s497 = sand.u32 %s142, 1
        %s498 = smul.addr %s497, 8
        %s499 = scalar_lea.vmem [#allocation10], %s498
        // Predicated region
        $region57: #{tpu_custom_call.1} parent=39 // pred_check
          %p500 = pneg %p152
        $region58: #{tpu_custom_call.1} parent=39 // pred_check_branch
          %502 = sbr.rel (%p500) target = $region60
        $region59: #{tpu_custom_call.1} parent=39 // pred_region
          %504 = vsyncadd %s496, 0
          %s505 = smul.addr %s24, 8
          %s506 = scalar_lea.hbm %s5, %s505
          %s508 = sshll.u32 %s499, 4
          %s509 = int_to_ptr.vmem [resolvable:$true] %s508
          %s510 = sshll.u32 %s506, 4
          %s511 = int_to_ptr.hbm [resolvable:$true] %s510
          %513 = dma.vmem_to_hbm [thread:$0]  %s509, 128, %s511, %s496
        $region60: #{tpu_custom_call.1} parent=39 // pred_fallthru
          _
      $region40: #{tpu_custom_call.1} parent=5 // pred_fallthru
        _
      %p514 = scmp.le.s32.totalorder 2, %s19
      // Predicated region
      $region61: #{tpu_custom_call.1} parent=5 // pred_check
        %p515 = pneg %p514
      $region62: #{tpu_custom_call.1} parent=5 // pred_check_branch
        %517 = sbr.rel (%p515) target = $region64
      $region63: #{tpu_custom_call.1} parent=5 // pred_region
        %s518 = ssub.s32 %s19, 2
        // Predicated region
        $region65: #{tpu_custom_call.1} parent=63 // pred_check
          %p519 = pneg %p158
        $region66: #{tpu_custom_call.1} parent=63 // pred_check_branch
          %521 = sbr.rel (%p519) target = $region68
        $region67: #{tpu_custom_call.1} parent=63 // pred_region
          %s522 = sand.u32 %s143, 1
          %s523 = scalar_lea.sflag [#allocation4], %s522
          %s524 = sand.u32 %s143, 1
          %s525 = smul.addr %s524, 8
          %s526 = scalar_lea.vmem [#allocation10], %s525
          %528 = dma.done %s523, 128
        $region68: #{tpu_custom_call.1} parent=63 // pred_fallthru
          _
      $region64: #{tpu_custom_call.1} parent=5 // pred_fallthru
        _
    $region6: #{tpu_custom_call.1} parent=1 // loop_footer
      %s23 = sadd.s32 1, %s19
    $region7: #{tpu_custom_call.1} parent=1 // loop_footer_branch
      %18 = sbr.rel target = $region3
    $region8: #{tpu_custom_call.1} parent=1 // loop_exit
      _
    %529 = vsyncpa [#allocation3], 1
    %s530 = scalar_lea.sflag [#allocation3], 1
    %531 = vsyncpa %s530, 1
    %532 = vsyncpa [#allocation6], 1
    %533 = vsyncpa [#allocation9], 1
    %534 = vsyncpa [#allocation4], 1
    %s535 = scalar_lea.sflag [#allocation4], 1
    %536 = vsyncpa %s535, 1

// kernel: tpu_custom_call.1
$region0: #{tpu_custom_call.1}
  #allocation0 [shape = 'u32[]', space=smem, size = 0x4, offset = 0x4, fixed_abs, tag = 'smem constant byte address 0x4 - core index']
  #allocation1 [shape = 'u32[72,128]{1,0:T(1,128)}', space=vmem, size = 0x9000, scoped, tag = 'internal scratch']
  %s0 = inlined_call_operand.hbm [shape: f32[16,32], index: 0, kind: input, shape index: {}]
  %s1 = inlined_call_operand.hbm [shape: bf16[32,128], index: 1, kind: input, shape index: {}]
  %s2 = inlined_call_operand.hbm [shape: bf16[128,128], index: 2, kind: input, shape index: {}]
  %s3 = inlined_call_operand.hbm [shape: bf16[128,128], index: 3, kind: input, shape index: {}]
  %s4 = inlined_call_operand.vmem [shape: f32[1,128], index: 4, kind: input, shape index: {}]
  %s5 = inlined_call_operand.hbm [shape: f32[16,128], index: 5, kind: output, shape index: {}]
  %s6 = sld [smem:[#allocation0]]
  $region69: #{tpu_custom_call.1} parent=0
    _
  %s8 = ssub.s32 1, %s6
  %s9 = scalar_select 0, %s8, %s6
  $region1: #{tpu_custom_call.1} parent=0
    #allocation2 [shape = 'u8[8192]{0}', space=vmem, size = 0x2000, scoped, tag = 'input window, operand 0']
    #allocation3 [shape = 's32[2]{0}', space=sflag, size = 0x8, scoped, tag = 'scoped memory for tpu_custom_call.1']
    #allocation4 [shape = 's32[2]{0}', space=sflag, size = 0x8, scoped, tag = 'scoped memory for tpu_custom_call.1']
    #allocation5 [shape = 'u8[8192]{0}', space=vmem, size = 0x2000, scoped, tag = 'input window, operand 1, single buffered']
    #allocation6 [shape = 's32[1]{0}', space=sflag, size = 0x4, scoped, tag = 'scoped memory for tpu_custom_call.1']
    #allocation7 [shape = 'u8[32768]{0}', space=vmem, size = 0x8000, scoped, tag = 'input window, operand 2, single buffered']
    #allocation8 [shape = 'u8[32768]{0}', space=vmem, size = 0x8000, scoped, tag = 'input window, operand 3, single buffered']
    #allocation9 [shape = 's32[1]{0}', space=sflag, size = 0x4, scoped, tag = 'scoped memory for tpu_custom_call.1']
    #allocation10 [shape = 'u8[8192]{0}', space=vmem, size = 0x2000, scoped, tag = 'output window, operand 0']
    %10 = vsyncpa [#allocation3], 0
    %s11 = scalar_lea.sflag [#allocation3], 1
    %12 = vsyncpa %s11, 0
    %13 = vsyncpa [#allocation6], 0
    %14 = vsyncpa [#allocation9], 0
    %15 = vsyncpa [#allocation4], 0
    %s16 = scalar_lea.sflag [#allocation4], 1
    %17 = vsyncpa %s16, 0
    loop: start=0, step=1, limit=4
    $region2: #{tpu_custom_call.1} parent=1 // loop_pre_header
      _
    $region3: #{tpu_custom_call.1} parent=1 // loop_header
      %s19 = sphi 0, %s23
      %p20 = scmp.ge.s32.totalorder %s19, 4
      %s29 = sphi 0, %s31
      %s32 = sphi 0, %s29
      %s33 = sphi 0, %s32
      %s49 = sphi 0, %s33
      %s53 = sphi 0, %s53
      %s55 = sphi 0, %s53
      %s56 = sphi 0, %s55
      %s70 = sphi 0, %s56
      %s74 = sphi 0, %s74
      %s76 = sphi 0, %s74
      %s77 = sphi 0, %s76
      %s91 = sphi 0, %s77
      %s95 = sphi 0, %s95
      %s97 = sphi 0, %s95
      %s98 = sphi 0, %s97
      %s112 = sphi 0, %s98
      %s116 = sphi 0, %s116
      %s118 = sphi 0, %s116
      %s119 = sphi 0, %s118
      %s133 = sphi 0, %s119
      %s139 = sphi 0, %s141
      %s142 = sphi 0, %s139
      %s143 = sphi 0, %s142
      %s159 = sphi 0, %s143
    $region4: #{tpu_custom_call.1} parent=1 // loop_header_branch
      %22 = sbr.rel (%p20) target = $region8
    $region5: #{tpu_custom_call.1} parent=1 // loop_body
      %s24 = ssub.s32 %s19, 1
      %s25 = ssub.s32 %s19, 2
      %s26 = sadd.s32 %s19, 1
      %s27 = ssub.s32 %s19, %s26
      %p28 = scmp.eq.s32.totalorder %s27, 0
      %s30 = sadd.s32 %s29, 1
      %s31 = scalar_select %p28, %s29, %s30
      %p34 = pneg %p28
      %p35 = scmp.eq.s32.totalorder %s19, 1
      %p36 = por %p34, %p35
      %p37 = scmp.ne.s32.totalorder %s29, %s32
      %p38 = scmp.eq.s32.totalorder %s19, 0
      %p39 = por %p37, %p38
      %p40 = scmp.ne.s32.totalorder %s29, %s32
      %p41 = scmp.eq.s32.totalorder %s24, 1
      %p42 = por %p40, %p41
      %p43 = scmp.ne.s32.totalorder %s32, %s33
      %p44 = scmp.eq.s32.totalorder %s24, 0
      %p45 = por %p43, %p44
      %p46 = scmp.ne.s32.totalorder %s32, %s33
      %p47 = scmp.eq.s32.totalorder %s25, 1
      %p48 = por %p46, %p47
      %p50 = scmp.ne.s32.totalorder %s33, %s49
      %p51 = scmp.eq.s32.totalorder %s25, 0
      %p52 = por %p50, %p51
      %s54 = sadd.s32 %s53, 1
      %p57 = scmp.eq.s32.totalorder %s19, 1
      %p58 = scmp.ne.s32.totalorder %s53, %s55
      %p59 = scmp.eq.s32.totalorder %s19, 0
      %p60 = por %p58, %p59
      %p61 = scmp.ne.s32.totalorder %s53, %s55
      %p62 = scmp.eq.s32.totalorder %s24, 1
      %p63 = por %p61, %p62
      %p64 = scmp.ne.s32.totalorder %s55, %s56
      %p65 = scmp.eq.s32.totalorder %s24, 0
      %p66 = por %p64, %p65
      %p67 = scmp.ne.s32.totalorder %s55, %s56
      %p68 = scmp.eq.s32.totalorder %s25, 1
      %p69 = por %p67, %p68
      %p71 = scmp.ne.s32.totalorder %s56, %s70
      %p72 = scmp.eq.s32.totalorder %s25, 0
      %p73 = por %p71, %p72
      %s75 = sadd.s32 %s74, 1
      %p78 = scmp.eq.s32.totalorder %s19, 1
      %p79 = scmp.ne.s32.totalorder %s74, %s76
      %p80 = scmp.eq.s32.totalorder %s19, 0
      %p81 = por %p79, %p80
      %p82 = scmp.ne.s32.totalorder %s74, %s76
      %p83 = scmp.eq.s32.totalorder %s24, 1
      %p84 = por %p82, %p83
      %p85 = scmp.ne.s32.totalorder %s76, %s77
      %p86 = scmp.eq.s32.totalorder %s24, 0
      %p87 = por %p85, %p86
      %p88 = scmp.ne.s32.totalorder %s76, %s77
      %p89 = scmp.eq.s32.totalorder %s25, 1
      %p90 = por %p88, %p89
      %p92 = scmp.ne.s32.totalorder %s77, %s91
      %p93 = scmp.eq.s32.totalorder %s25, 0
      %p94 = por %p92, %p93
      %s96 = sadd.s32 %s95, 1
      %p99 = scmp.eq.s32.totalorder %s19, 1
      %p100 = scmp.ne.s32.totalorder %s95, %s97
      %p101 = scmp.eq.s32.totalorder %s19, 0
      %p102 = por %p100, %p101
      %p103 = scmp.ne.s32.totalorder %s95, %s97
      %p104 = scmp.eq.s32.totalorder %s24, 1
      %p105 = por %p103, %p104
      %p106 = scmp.ne.s32.totalorder %s97, %s98
      %p107 = scmp.eq.s32.totalorder %s24, 0
      %p108 = por %p106, %p107
      %p109 = scmp.ne.s32.totalorder %s97, %s98
      %p110 = scmp.eq.s32.totalorder %s25, 1
      %p111 = por %p109, %p110
      %p113 = scmp.ne.s32.totalorder %s98, %s112
      %p114 = scmp.eq.s32.totalorder %s25, 0
      %p115 = por %p113, %p114
      %s117 = sadd.s32 %s116, 1
      %p120 = scmp.eq.s32.totalorder %s19, 1
      %p121 = scmp.ne.s32.totalorder %s116, %s118
      %p122 = scmp.eq.s32.totalorder %s19, 0
      %p123 = por %p121, %p122
      %p124 = scmp.ne.s32.totalorder %s116, %s118
      %p125 = scmp.eq.s32.totalorder %s24, 1
      %p126 = por %p124, %p125
      %p127 = scmp.ne.s32.totalorder %s118, %s119
      %p128 = scmp.eq.s32.totalorder %s24, 0
      %p129 = por %p127, %p128
      %p130 = scmp.ne.s32.totalorder %s118, %s119
      %p131 = scmp.eq.s32.totalorder %s25, 1
      %p132 = por %p130, %p131
      %p134 = scmp.ne.s32.totalorder %s119, %s133
      %p135 = scmp.eq.s32.totalorder %s25, 0
      %p136 = por %p134, %p135
      %s137 = ssub.s32 %s19, %s26
      %p138 = scmp.eq.s32.totalorder %s137, 0
      %s140 = sadd.s32 %s139, 1
      %s141 = scalar_select %p138, %s139, %s140
      %p144 = pneg %p138
      %p145 = scmp.eq.s32.totalorder %s19, 1
      %p146 = por %p144, %p145
      %p147 = scmp.ne.s32.totalorder %s139, %s142
      %p148 = scmp.eq.s32.totalorder %s19, 0
      %p149 = por %p147, %p148
      %p150 = scmp.ne.s32.totalorder %s139, %s142
      %p151 = scmp.eq.s32.totalorder %s24, 1
      %p152 = por %p150, %p151
      %p153 = scmp.ne.s32.totalorder %s142, %s143
      %p154 = scmp.eq.s32.totalorder %s24, 0
      %p155 = por %p153, %p154
      %p156 = scmp.ne.s32.totalorder %s142, %s143
      %p157 = scmp.eq.s32.totalorder %s25, 1
      %p158 = por %p156, %p157
      %p160 = scmp.ne.s32.totalorder %s143, %s159
      %p161 = scmp.eq.s32.totalorder %s25, 0
      %p162 = por %p160, %p161
      %p163 = scmp.le.s32.totalorder 1, %s19
      %p164 = scmp.lt.s32.totalorder %s19, 3
      %p165 = pnand %p163, %p164
      %p166 = pneg %p165
      // Predicated region
      $region9: #{tpu_custom_call.1} parent=5 // pred_check
        _
      $region10: #{tpu_custom_call.1} parent=5 // pred_check_branch
        %168 = sbr.rel (%p165) target = $region12
      $region11: #{tpu_custom_call.1} parent=5 // pred_region
        %s169 = ssub.s32 %s19, 1
        // Predicated region
        $region13: #{tpu_custom_call.1} parent=11 // pred_check
          %p170 = pneg %p66
        $region14: #{tpu_custom_call.1} parent=11 // pred_check_branch
          %172 = sbr.rel (%p170) target = $region16
        $region15: #{tpu_custom_call.1} parent=11 // pred_region
          %174 = vsyncadd [#allocation6], 0
          %s175 = sshll.u32 %s1, 4
          %s176 = int_to_ptr.hbm [resolvable:$true] %s175
          %s177 = sshll.u32 [#allocation5], 4
          %s178 = int_to_ptr.vmem [resolvable:$true] %s177
          %183 = dma.hbm_to_vmem [thread:$0]  %s176, 256, %s178, [#allocation6], 64, 64, 4
        $region16: #{tpu_custom_call.1} parent=11 // pred_fallthru
          _
        // Predicated region
        $region17: #{tpu_custom_call.1} parent=11 // pred_check
          %p184 = pneg %p87
        $region18: #{tpu_custom_call.1} parent=11 // pred_check_branch
          %186 = sbr.rel (%p184) target = $region20
        $region19: #{tpu_custom_call.1} parent=11 // pred_region
          %188 = vsyncadd [#allocation6], 0
          %s189 = sshll.u32 %s2, 4
          %s190 = int_to_ptr.hbm [resolvable:$true] %s189
          %s191 = sshll.u32 [#allocation7], 4
          %s192 = int_to_ptr.vmem [resolvable:$true] %s191
          %197 = dma.hbm_to_vmem [thread:$0]  %s190, 1024, %s192, [#allocation6], 64, 64, 4
        $region20: #{tpu_custom_call.1} parent=11 // pred_fallthru
          _
        // Predicated region
        $region21: #{tpu_custom_call.1} parent=11 // pred_check
          %p198 = pneg %p108
        $region22: #{tpu_custom_call.1} parent=11 // pred_check_branch
          %200 = sbr.rel (%p198) target = $region24
        $region23: #{tpu_custom_call.1} parent=11 // pred_region
          %202 = vsyncadd [#allocation9], 0
          %s203 = sshll.u32 %s3, 4
          %s204 = int_to_ptr.hbm [resolvable:$true] %s203
          %s205 = sshll.u32 [#allocation8], 4
          %s206 = int_to_ptr.vmem [resolvable:$true] %s205
          %211 = dma.hbm_to_vmem [thread:$0]  %s204, 1024, %s206, [#allocation9], 64, 64, 4
        $region24: #{tpu_custom_call.1} parent=11 // pred_fallthru
          _
        // Predicated region
        $region25: #{tpu_custom_call.1} parent=11 // pred_check
          %p212 = pneg %p129
        $region26: #{tpu_custom_call.1} parent=11 // pred_check_branch
          %214 = sbr.rel (%p212) target = $region28
        $region27: #{tpu_custom_call.1} parent=11 // pred_region
          _
        $region28: #{tpu_custom_call.1} parent=11 // pred_fallthru
          _
      $region12: #{tpu_custom_call.1} parent=5 // pred_fallthru
        _
      %p215 = scmp.lt.s32.totalorder %s19, 2
      // Predicated region
      $region29: #{tpu_custom_call.1} parent=5 // pred_check
        %p216 = pneg %p215
      $region30: #{tpu_custom_call.1} parent=5 // pred_check_branch
        %218 = sbr.rel (%p216) target = $region32
      $region31: #{tpu_custom_call.1} parent=5 // pred_region
        // Predicated region
        $region33: #{tpu_custom_call.1} parent=31 // pred_check
          %p219 = pneg %p39
        $region34: #{tpu_custom_call.1} parent=31 // pred_check_branch
          %221 = sbr.rel (%p219) target = $region36
        $region35: #{tpu_custom_call.1} parent=31 // pred_region
          %s222 = sand.u32 %s29, 1
          %s223 = scalar_lea.sflag [#allocation3], %s222
          %s224 = sand.u32 %s29, 1
          %s225 = smul.addr %s224, 8
          %s226 = scalar_lea.vmem [#allocation2], %s225
          %228 = vsyncadd %s223, 0
          %s229 = smul.addr %s19, 8
          %s230 = scalar_lea.hbm %s0, %s229
          %s232 = sshll.u32 %s230, 4
          %s233 = int_to_ptr.hbm [resolvable:$true] %s232
          %s234 = sshll.u32 %s226, 4
          %s235 = int_to_ptr.vmem [resolvable:$true] %s234
          %237 = dma.hbm_to_vmem [thread:$0]  %s233, 128, %s235, %s223
        $region36: #{tpu_custom_call.1} parent=31 // pred_fallthru
          _
      $region32: #{tpu_custom_call.1} parent=5 // pred_fallthru
        _
      %p238 = scmp.le.s32.totalorder 1, %s19
      %p239 = scmp.lt.s32.totalorder %s19, 3
      %p240 = pnand %p238, %p239
      %p241 = pneg %p240
      // Predicated region
      $region37: #{tpu_custom_call.1} parent=5 // pred_check
        _
      $region38: #{tpu_custom_call.1} parent=5 // pred_check_branch
        %243 = sbr.rel (%p240) target = $region40
      $region39: #{tpu_custom_call.1} parent=5 // pred_region
        %s244 = ssub.s32 %s19, 1
        %s245 = sand.u32 %s32, 1
        %s246 = scalar_lea.sflag [#allocation3], %s245
        %s247 = sand.u32 %s32, 1
        %s248 = smul.addr %s247, 8
        %s249 = scalar_lea.vmem [#allocation2], %s248
        // Predicated region
        $region41: #{tpu_custom_call.1} parent=39 // pred_check
          %p250 = pneg %p45
        $region42: #{tpu_custom_call.1} parent=39 // pred_check_branch
          %252 = sbr.rel (%p250) target = $region44
        $region43: #{tpu_custom_call.1} parent=39 // pred_region
          %254 = dma.done %s246, 128
        $region44: #{tpu_custom_call.1} parent=39 // pred_fallthru
          _
        // Predicated region
        $region45: #{tpu_custom_call.1} parent=39 // pred_check
          %p255 = pneg %p66
        $region46: #{tpu_custom_call.1} parent=39 // pred_check_branch
          %257 = sbr.rel (%p255) target = $region48
        $region47: #{tpu_custom_call.1} parent=39 // pred_region
          %259 = dma.done [#allocation6], 256
        $region48: #{tpu_custom_call.1} parent=39 // pred_fallthru
          _
        // Predicated region
        $region49: #{tpu_custom_call.1} parent=39 // pred_check
          %p260 = pneg %p87
        $region50: #{tpu_custom_call.1} parent=39 // pred_check_branch
          %262 = sbr.rel (%p260) target = $region52
        $region51: #{tpu_custom_call.1} parent=39 // pred_region
          %264 = dma.done [#allocation6], 1024
        $region52: #{tpu_custom_call.1} parent=39 // pred_fallthru
          _
        // Predicated region
        $region53: #{tpu_custom_call.1} parent=39 // pred_check
          %p265 = pneg %p108
        $region54: #{tpu_custom_call.1} parent=39 // pred_check_branch
          %267 = sbr.rel (%p265) target = $region56
        $region55: #{tpu_custom_call.1} parent=39 // pred_region
          %269 = dma.done [#allocation9], 1024
        $region56: #{tpu_custom_call.1} parent=39 // pred_fallthru
          _
        %s270 = sand.u32 %s32, 1
        %s271 = scalar_lea.sflag [#allocation3], %s270
        %s272 = sand.u32 %s32, 1
        %s273 = smul.addr %s272, 8
        %s274 = scalar_lea.vmem [#allocation2], %s273
        %p275 = pneg %p45
        %p276 = pneg %p42
        %p277 = pneg %p66
        %p278 = pneg %p63
        %p279 = pneg %p87
        %p280 = pneg %p84
        %p281 = pneg %p108
        %p282 = pneg %p105
        %p283 = pneg %p129
        %p284 = pneg %p126
        %p285 = pneg %p155
        %p286 = pneg %p152
        %s287 = sand.u32 %s142, 1
        %s288 = scalar_lea.sflag [#allocation4], %s287
        %s289 = sand.u32 %s142, 1
        %s290 = smul.addr %s289, 8
        %s291 = scalar_lea.vmem [#allocation10], %s290
        %v293 = vld [vmem:[%s249] sm:$0xff]
        %v294 = vpack.c.bf16 %v293, %v293
        %v295 = vld [vmem:[#allocation5] sm:$0xf]
        %v296 = vld [vmem:[#allocation5 + $0x4] sm:$0xf]
        %v297 = vld [vmem:[#allocation5 + $0x8] sm:$0xf]
        %v298 = vld [vmem:[#allocation5 + $0xc] sm:$0xf]
        %v303 = vunpack.c.l.b16 %v295
        %v304 = vunpack.c.l.b16 %v296
        %v305 = vunpack.c.l.b16 %v297
        %v306 = vunpack.c.l.b16 %v298
        %v307 = vpack.c.b16 %v304, %v303
        %v308 = vpack.c.b16 %v306, %v305
        %vm311 = vcmask 261120
        %v313 = vsel %vm311, %v294, 0
        %315 = vmatpush.bf16.msra.mxu0 0
        %316 = vmatpush.bf16.msra.mxu0 0
        %317 = vmatpush.bf16.msra.mxu0 0
        %318 = vmatpush.bf16.msra.mxu0 0
        %319 = vmatpush.bf16.msra.mxu0 0
        %320 = vmatpush.bf16.msra.mxu0 0
        %321 = vmatpush.bf16.msra.mxu0 %v308
        %322 = vmatpush.bf16.msra.mxu0 %v307
        %323 = vmatmul.bf16.gmra.mxu0 %v313
        %v324 = vpop.f32.mrf.mxu0
        %v325 = vadd.f32 0.0, %v324
        %v326 = vpop.f32.mrf.mxu0
        %327 = vdwg.mxu0
        %v328 = vmax.f32 %v325, 0.0
        %v329 = vmin.f32 %v328, 4.0
        %v330 = vround.ne.pseudo %v329
        %v331 = vpack.c.bf16 %v330, %v330
        %v332 = vld [vmem:[#allocation7] sm:$0xf]
        %v333 = vld [vmem:[#allocation7 + $0x4] sm:$0xf]
        %v334 = vld [vmem:[#allocation7 + $0x8] sm:$0xf]
        %v335 = vld [vmem:[#allocation7 + $0xc] sm:$0xf]
        %v336 = vld [vmem:[#allocation7 + $0x10] sm:$0xf]
        %v337 = vld [vmem:[#allocation7 + $0x14] sm:$0xf]
        %v338 = vld [vmem:[#allocation7 + $0x18] sm:$0xf]
        %v339 = vld [vmem:[#allocation7 + $0x1c] sm:$0xf]
        %v340 = vld [vmem:[#allocation7 + $0x20] sm:$0xf]
        %v341 = vld [vmem:[#allocation7 + $0x24] sm:$0xf]
        %v342 = vld [vmem:[#allocation7 + $0x28] sm:$0xf]
        %v343 = vld [vmem:[#allocation7 + $0x2c] sm:$0xf]
        %v344 = vld [vmem:[#allocation7 + $0x30] sm:$0xf]
        %v345 = vld [vmem:[#allocation7 + $0x34] sm:$0xf]
        %v346 = vld [vmem:[#allocation7 + $0x38] sm:$0xf]
        %v347 = vld [vmem:[#allocation7 + $0x3c] sm:$0xf]
        %v364 = vunpack.c.l.b16 %v332
        %v365 = vunpack.c.l.b16 %v333
        %v366 = vunpack.c.l.b16 %v334
        %v367 = vunpack.c.l.b16 %v335
        %v368 = vunpack.c.l.b16 %v336
        %v369 = vunpack.c.l.b16 %v337
        %v370 = vunpack.c.l.b16 %v338
        %v371 = vunpack.c.l.b16 %v339
        %v372 = vunpack.c.l.b16 %v340
        %v373 = vunpack.c.l.b16 %v341
        %v374 = vunpack.c.l.b16 %v342
        %v375 = vunpack.c.l.b16 %v343
        %v376 = vunpack.c.l.b16 %v344
        %v377 = vunpack.c.l.b16 %v345
        %v378 = vunpack.c.l.b16 %v346
        %v379 = vunpack.c.l.b16 %v347
        %v380 = vpack.c.b16 %v365, %v364
        %v381 = vpack.c.b16 %v367, %v366
        %v382 = vpack.c.b16 %v369, %v368
        %v383 = vpack.c.b16 %v371, %v370
        %v384 = vpack.c.b16 %v373, %v372
        %v385 = vpack.c.b16 %v375, %v374
        %v386 = vpack.c.b16 %v377, %v376
        %v387 = vpack.c.b16 %v379, %v378
        %396 = vmatpush.bf16.msra.mxu0 %v387
        %397 = vmatpush.bf16.msra.mxu0 %v386
        %398 = vmatpush.bf16.msra.mxu0 %v385
        %399 = vmatpush.bf16.msra.mxu0 %v384
        %400 = vmatpush.bf16.msra.mxu0 %v383
        %401 = vmatpush.bf16.msra.mxu0 %v382
        %402 = vmatpush.bf16.msra.mxu0 %v381
        %403 = vmatpush.bf16.msra.mxu0 %v380
        %404 = vmatmul.bf16.gmra.mxu0 %v331
        %v405 = vpop.f32.mrf.mxu0
        %v406 = vadd.f32 0.0, %v405
        %v407 = vpop.f32.mrf.mxu0
        %408 = vdwg.mxu0
        %v409 = vmax.f32 %v406, 0.0
        %v410 = vmin.f32 %v409, 4.0
        %v411 = vround.ne.pseudo %v410
        %v412 = vpack.c.bf16 %v411, %v411
        %v413 = vld [vmem:[#allocation8] sm:$0xf]
        %v414 = vld [vmem:[#allocation8 + $0x4] sm:$0xf]
        %v415 = vld [vmem:[#allocation8 + $0x8] sm:$0xf]
        %v416 = vld [vmem:[#allocation8 + $0xc] sm:$0xf]
        %v417 = vld [vmem:[#allocation8 + $0x10] sm:$0xf]
        %v418 = vld [vmem:[#allocation8 + $0x14] sm:$0xf]
        %v419 = vld [vmem:[#allocation8 + $0x18] sm:$0xf]
        %v420 = vld [vmem:[#allocation8 + $0x1c] sm:$0xf]
        %v421 = vld [vmem:[#allocation8 + $0x20] sm:$0xf]
        %v422 = vld [vmem:[#allocation8 + $0x24] sm:$0xf]
        %v423 = vld [vmem:[#allocation8 + $0x28] sm:$0xf]
        %v424 = vld [vmem:[#allocation8 + $0x2c] sm:$0xf]
        %v425 = vld [vmem:[#allocation8 + $0x30] sm:$0xf]
        %v426 = vld [vmem:[#allocation8 + $0x34] sm:$0xf]
        %v427 = vld [vmem:[#allocation8 + $0x38] sm:$0xf]
        %v428 = vld [vmem:[#allocation8 + $0x3c] sm:$0xf]
        %v429 = vld [vmem:[%s4] sm:$0x1]
        %v431 = vperm.slane %v429, 0
        %v449 = vunpack.c.l.b16 %v413
        %v450 = vunpack.c.l.b16 %v414
        %v451 = vunpack.c.l.b16 %v415
        %v452 = vunpack.c.l.b16 %v416
        %v453 = vunpack.c.l.b16 %v417
        %v454 = vunpack.c.l.b16 %v418
        %v455 = vunpack.c.l.b16 %v419
        %v456 = vunpack.c.l.b16 %v420
        %v457 = vunpack.c.l.b16 %v421
        %v458 = vunpack.c.l.b16 %v422
        %v459 = vunpack.c.l.b16 %v423
        %v460 = vunpack.c.l.b16 %v424
        %v461 = vunpack.c.l.b16 %v425
        %v462 = vunpack.c.l.b16 %v426
        %v463 = vunpack.c.l.b16 %v427
        %v464 = vunpack.c.l.b16 %v428
        %v465 = vpack.c.b16 %v450, %v449
        %v466 = vpack.c.b16 %v452, %v451
        %v467 = vpack.c.b16 %v454, %v453
        %v468 = vpack.c.b16 %v456, %v455
        %v469 = vpack.c.b16 %v458, %v457
        %v470 = vpack.c.b16 %v460, %v459
        %v471 = vpack.c.b16 %v462, %v461
        %v472 = vpack.c.b16 %v464, %v463
        %481 = vmatpush.bf16.msra.mxu0 %v472
        %482 = vmatpush.bf16.msra.mxu0 %v471
        %483 = vmatpush.bf16.msra.mxu0 %v470
        %484 = vmatpush.bf16.msra.mxu0 %v469
        %485 = vmatpush.bf16.msra.mxu0 %v468
        %486 = vmatpush.bf16.msra.mxu0 %v467
        %487 = vmatpush.bf16.msra.mxu0 %v466
        %488 = vmatpush.bf16.msra.mxu0 %v465
        %489 = vmatmul.bf16.gmra.mxu0 %v412
        %v490 = vpop.f32.mrf.mxu0
        %v491 = vadd.f32 %v431, %v490
        %v492 = vpop.f32.mrf.mxu0
        %493 = vdwg.mxu0
        %494 = vst [vmem:[%s291] sm:$0xff] %v491
        %s495 = sand.u32 %s142, 1
        %s496 = scalar_lea.sflag [#allocation4], %s495
        %s497 = sand.u32 %s142, 1
        %s498 = smul.addr %s497, 8
        %s499 = scalar_lea.vmem [#allocation10], %s498
        // Predicated region
        $region57: #{tpu_custom_call.1} parent=39 // pred_check
          %p500 = pneg %p152
        $region58: #{tpu_custom_call.1} parent=39 // pred_check_branch
          %502 = sbr.rel (%p500) target = $region60
        $region59: #{tpu_custom_call.1} parent=39 // pred_region
          %504 = vsyncadd %s496, 0
          %s505 = smul.addr %s24, 8
          %s506 = scalar_lea.hbm %s5, %s505
          %s508 = sshll.u32 %s499, 4
          %s509 = int_to_ptr.vmem [resolvable:$true] %s508
          %s510 = sshll.u32 %s506, 4
          %s511 = int_to_ptr.hbm [resolvable:$true] %s510
          %513 = dma.vmem_to_hbm [thread:$0]  %s509, 128, %s511, %s496
        $region60: #{tpu_custom_call.1} parent=39 // pred_fallthru
          _
      $region40: #{tpu_custom_call.1} parent=5 // pred_fallthru
        _
      %p514 = scmp.le.s32.totalorder 2, %s19
      // Predicated region
      $region61: #{tpu_custom_call.1} parent=5 // pred_check
        %p515 = pneg %p514
      $region62: #{tpu_custom_call.1} parent=5 // pred_check_branch
        %517 = sbr.rel (%p515) target = $region64
      $region63: #{tpu_custom_call.1} parent=5 // pred_region
        %s518 = ssub.s32 %s19, 2
        // Predicated region
        $region65: #{tpu_custom_call.1} parent=63 // pred_check
          %p519 = pneg %p158
        $region66: #{tpu_custom_call.1} parent=63 // pred_check_branch
          %521 = sbr.rel (%p519) target = $region68
        $region67: #{tpu_custom_call.1} parent=63 // pred_region
          %s522 = sand.u32 %s143, 1
          %s523 = scalar_lea.sflag [#allocation4], %s522
          %s524 = sand.u32 %s143, 1
          %s525 = smul.addr %s524, 8
          %s526 = scalar_lea.vmem [#allocation10], %s525
          %528 = dma.done %s523, 128
        $region68: #{tpu_custom_call.1} parent=63 // pred_fallthru
          _
      $region64: #{tpu_custom_call.1} parent=5 // pred_fallthru
        _
    $region6: #{tpu_custom_call.1} parent=1 // loop_footer
      %s23 = sadd.s32 1, %s19
    $region7: #{tpu_custom_call.1} parent=1 // loop_footer_branch
      %18 = sbr.rel target = $region3
    $region8: #{tpu_custom_call.1} parent=1 // loop_exit
      _
    %529 = vsyncpa [#allocation3], 1
    %s530 = scalar_lea.sflag [#allocation3], 1
    %531 = vsyncpa %s530, 1
    %532 = vsyncpa [#allocation6], 1
    %533 = vsyncpa [#allocation9], 1
    %534 = vsyncpa [#allocation4], 1
    %s535 = scalar_lea.sflag [#allocation4], 1
    %536 = vsyncpa %s535, 1

</llo_original>
